<compile_context>
chip_gen: v6e
topology: v6e:2x2x1
jax: 0.10.0
libtpu: 0.0.40
codegen_flags: <defaults>
</compile_context>

<pallas_src>
import functools

import jax
import jax.numpy as jnp
from jax.experimental import pallas as pl
from jax.experimental.pallas import tpu as pltpu

LANE = 128
MIN_PALLAS_ELEMS = 256 * 1024  # below this, launch/pipeline overhead dominates


def _chip_config():
    """Returns (tensorcores_per_chip, max_tile_rows, use_core_parallel)."""
    try:
        kind = jax.devices()[0].device_kind.lower()
    except Exception:  # non-TPU / interpret contexts
        kind = ""
    if "v7" in kind:
        # v7x: 2 TCs per chip, 64 MiB VMEM/TC -> 8192-row tiles + explicit core split.
        return 2, 8192, True
    if "v5" in kind and ("lite" in kind or "5e" in kind):
        # v5e: 1 TC, 820 GB/s HBM; per-step DMA already dwarfs step overhead.
        return 1, 4096, False
    # v6e and other single-TC chips: large tiles to amortize per-step overhead.
    return 1, 8192, False


def _loss_kernel(real_ref, fake_ref, out_ref, acc_ref, *,
                 rows, tile_rows, tiles_per_core, total_tiles):
    c = pl.program_id(0)          # core / tile-group index
    j = pl.program_id(1)          # tile index within this core's range
    t = c * tiles_per_core + j    # logical (unclamped) tile index

    is_first = j == 0
    # Only the logically-last tile (and clamped beyond-the-end duplicates from
    # the core split) can contain invalid rows.
    is_tail = t >= total_tiles - 1

    r = real_ref[...].astype(jnp.float32)
    f = fake_ref[...].astype(jnp.float32)
    dr = r - 1.0

    @pl.when(jnp.logical_not(is_tail))
    def _():
        v = dr * dr + f * f

        @pl.when(is_first)
        def _():
            acc_ref[...] = v          # fold zero-init into step 0

        @pl.when(jnp.logical_not(is_first))
        def _():
            acc_ref[...] += v

    @pl.when(is_tail)
    def _():
        row_ids = jax.lax.broadcasted_iota(jnp.int32, (tile_rows, LANE), 0)
        valid = (t * tile_rows + row_ids) < rows
        v = jnp.where(valid, dr * dr + f * f, 0.0)

        @pl.when(is_first)
        def _():
            acc_ref[...] = v

        @pl.when(jnp.logical_not(is_first))
        def _():
            acc_ref[...] += v

    @pl.when(j == tiles_per_core - 1)
    def _():
        # Single cross-sublane reduce per core; lane-dense (1, 1, 128) partial.
        out_ref[...] = jnp.sum(acc_ref[...], axis=0, keepdims=True)[None]


def cyclegan_discriminator_loss(pred_real, pred_fake, *,
                                min_pallas_elems=MIN_PALLAS_ELEMS):
    # TODO(synk): the PyTorch module allows differently-shaped real/fake preds
    # (two independent means); this kernel assumes a shared shape (CycleGAN case).
    assert pred_real.shape == pred_fake.shape, "CycleGAN D outputs share a shape"
    n = int(pred_real.size)
    inv_n = 1.0 / float(n)

    if n < min_pallas_elems:
        # Tiny PatchGAN outputs: plain XLA fusion is faster than a kernel launch.
        lr = jnp.mean((pred_real.astype(jnp.float32) - 1.0) ** 2)
        lf = jnp.mean(pred_fake.astype(jnp.float32) ** 2)
        return lr + lf

    flat_r = pred_real.reshape(-1)
    flat_f = pred_fake.reshape(-1)

    # 128-aligned prefix goes through the kernel; the <128-element tail is a
    # tiny XLA reduction. No jnp.pad -> no extra full-array HBM copy.
    rows = n // LANE
    n_main = rows * LANE
    if n_main < n:
        tr = flat_r[n_main:].astype(jnp.float32)
        tf = flat_f[n_main:].astype(jnp.float32)
        tail_sum = jnp.sum((tr - 1.0) ** 2) + jnp.sum(tf * tf)
    else:
        tail_sum = jnp.float32(0.0)

    if rows == 0:
        return tail_sum * inv_n

    real2d = flat_r[:n_main].reshape(rows, LANE)   # native dtype, lane-dense
    fake2d = flat_f[:n_main].reshape(rows, LANE)

    ncores_hw, max_tile_rows, use_core_parallel = _chip_config()
    tile_rows = rows if rows <= max_tile_rows else max_tile_rows
    total_tiles = pl.cdiv(rows, tile_rows)
    ncores = ncores_hw if total_tiles >= 2 else 1
    tiles_per_core = pl.cdiv(total_tiles, ncores)

    def data_idx(c, j):
        # Clamp beyond-the-end tiles of the core split to a valid block; their
        # contribution is fully masked out inside the kernel.
        return (jnp.minimum(c * tiles_per_core + j, total_tiles - 1), 0)

    kernel = functools.partial(
        _loss_kernel, rows=rows, tile_rows=tile_rows,
        tiles_per_core=tiles_per_core, total_tiles=total_tiles)

    itemsize = jnp.dtype(pred_real.dtype).itemsize
    tile_bytes = tile_rows * LANE * itemsize
    acc_bytes = tile_rows * LANE * 4
    # 2 inputs x 2 pipeline buffers + accumulator + slack (never below default).
    vmem_limit = max(2 * 2 * tile_bytes + acc_bytes + (4 << 20), 32 << 20)

    if ncores > 1 and use_core_parallel and hasattr(pltpu, "CORE_PARALLEL"):
        dims = (pltpu.CORE_PARALLEL, pltpu.ARBITRARY)   # real 2-TC split on v7x
    elif ncores > 1:
        dims = ("parallel", "arbitrary")
    else:
        dims = ("arbitrary", "arbitrary")

    cost = pl.CostEstimate(
        flops=6 * n,
        transcendentals=0,
        bytes_accessed=2 * n_main * itemsize + ncores * LANE * 4)

    partials = pl.pallas_call(
        kernel,
        out_shape=jax.ShapeDtypeStruct((ncores, 1, LANE), jnp.float32),
        grid_spec=pltpu.PrefetchScalarGridSpec(
            num_scalar_prefetch=0,
            grid=(ncores, tiles_per_core),
            in_specs=[
                pl.BlockSpec((tile_rows, LANE), data_idx),
                pl.BlockSpec((tile_rows, LANE), data_idx),
            ],
            out_specs=pl.BlockSpec((1, 1, LANE), lambda c, j: (c, 0, 0)),
            scratch_shapes=[pltpu.VMEM((tile_rows, LANE), jnp.float32)],
        ),
        compiler_params=pltpu.CompilerParams(
            dimension_semantics=dims,
            vmem_limit_bytes=vmem_limit,
        ),
        cost_estimate=cost,
    )(real2d, fake2d)

    # Mean over the true element count (masked tiles contributed exactly 0).
    return (jnp.sum(partials) + tail_sum) * inv_n


def _reference_loss(pred_real, pred_fake):
    pr = pred_real.astype(jnp.float32)
    pf = pred_fake.astype(jnp.float32)
    return jnp.mean((pr - 1.0) ** 2) + jnp.mean(pf ** 2)


if __name__ == "__main__":
    key = jax.random.PRNGKey(0)
    k1, k2, k3, k4, k5, k6 = jax.random.split(key, 6)

    pallas_loss = jax.jit(
        functools.partial(cyclegan_discriminator_loss, min_pallas_elems=0))

    # 1) Small PatchGAN-style NCHW outputs, forced through the Pallas path.
    pred_real = jax.random.normal(k1, (2, 4, 16, 16), dtype=jnp.float32)
    pred_fake = jax.random.normal(k2, (2, 4, 16, 16), dtype=jnp.float32)
    loss = jax.block_until_ready(pallas_loss(pred_real, pred_fake))
    ref = _reference_loss(pred_real, pred_fake)
    assert jnp.allclose(loss, ref, rtol=1e-5, atol=1e-5), (loss, ref)

    # 2) Ragged bf16 inputs (n not a multiple of 128): exercises native-dtype
    #    read + wrapper-side tail reduction (no jnp.pad copy).
    pr2 = jax.random.normal(k3, (2, 3, 70, 70), dtype=jnp.bfloat16)
    pf2 = jax.random.normal(k4, (2, 3, 70, 70), dtype=jnp.bfloat16)
    loss2 = jax.block_until_ready(pallas_loss(pr2, pf2))
    ref2 = _reference_loss(pr2, pf2)
    assert jnp.allclose(loss2, ref2, rtol=1e-4, atol=1e-4), (loss2, ref2)

    # 3) Multi-tile input: exercises the core split (where present), clamped
    #    beyond-the-end tiles, and the masked partial last tile.
    pr3 = jax.random.normal(k5, (2, 1, 750, 768), dtype=jnp.float32)
    pf3 = jax.random.normal(k6, (2, 1, 750, 768), dtype=jnp.float32)
    loss3 = jax.block_until_ready(pallas_loss(pr3, pf3))
    ref3 = _reference_loss(pr3, pf3)
    assert jnp.allclose(loss3, ref3, rtol=1e-4, atol=1e-4), (loss3, ref3)

    # 4) Default dispatch: tiny inputs take the pure-XLA fallback path.
    loss4 = jax.block_until_ready(
        jax.jit(cyclegan_discriminator_loss)(pred_real, pred_fake))
    assert jnp.allclose(loss4, ref, rtol=1e-5, atol=1e-5), (loss4, ref)

    print("KERNEL_OK")
</pallas_src>

<mosaic_0001>
module attributes {stable_mosaic.version = 11 : i64} {
  func.func @_loss_kernel(%arg0: i32, %arg1: i32, %arg2: memref<16x128xf32, #tpu.memory_space<vmem>>, %arg3: memref<16x128xf32, #tpu.memory_space<vmem>>, %arg4: memref<1x1x128xf32, #tpu.memory_space<vmem>>, %arg5: memref<16x128xf32, #tpu.memory_space<vmem>>) attributes {dimension_semantics = [#tpu.dimension_semantics<arbitrary>, #tpu.dimension_semantics<arbitrary>], iteration_bounds = array<i64: 1, 1>, scalar_prefetch = 0 : i64, scratch_operands = 1 : i64, tpu.core_type = #tpu.core_type<tc>, window_params = [{transform_indices = @transform_0, window_bounds = array<i64: 16, 128>}, {transform_indices = @transform_1, window_bounds = array<i64: 16, 128>}, {transform_indices = @transform_2, window_bounds = array<i64: 1, 1, 128>}]} {
    %c1_i32 = arith.constant 1 : i32
    %0 = arith.muli %arg0, %c1_i32 : i32
    %1 = arith.addi %0, %arg1 : i32
    %c0_i32 = arith.constant 0 : i32
    %2 = arith.cmpi eq, %arg1, %c0_i32 : i32
    %c0_i32_0 = arith.constant 0 : i32
    %3 = arith.cmpi sge, %1, %c0_i32_0 : i32
    %c0 = arith.constant 0 : index
    %c0_1 = arith.constant 0 : index
    %4 = vector.load %arg2[%c0, %c0_1] : memref<16x128xf32, #tpu.memory_space<vmem>>, vector<16x128xf32>
    %c0_2 = arith.constant 0 : index
    %c0_3 = arith.constant 0 : index
    %5 = vector.load %arg3[%c0_2, %c0_3] : memref<16x128xf32, #tpu.memory_space<vmem>>, vector<16x128xf32>
    %cst = arith.constant 1.000000e+00 : f32
    %6 = vector.broadcast %cst : f32 to vector<16x128xf32>
    %7 = arith.subf %4, %6 : vector<16x128xf32>
    %true = arith.constant true
    %8 = arith.xori %3, %true : i1
    %9 = arith.extui %8 : i1 to i32
    %c0_i32_4 = arith.constant 0 : i32
    %10 = arith.cmpi ne, %9, %c0_i32_4 : i32
    scf.if %10 {
      %16 = arith.mulf %7, %7 : vector<16x128xf32>
      %17 = arith.mulf %5, %5 : vector<16x128xf32>
      %18 = arith.addf %16, %17 : vector<16x128xf32>
      %19 = arith.extui %2 : i1 to i32
      %c0_i32_8 = arith.constant 0 : i32
      %20 = arith.cmpi ne, %19, %c0_i32_8 : i32
      scf.if %20 {
        %c0_11 = arith.constant 0 : index
        %c0_12 = arith.constant 0 : index
        %24 = vector.load %arg5[%c0_11, %c0_12] : memref<16x128xf32, #tpu.memory_space<vmem>>, vector<16x128xf32>
        tpu.vector_store %arg5[%c0_11, %c0_12], %18 {strides = array<i32>} : memref<16x128xf32, #tpu.memory_space<vmem>>, vector<16x128xf32>,
      } else {
      }
      %true_9 = arith.constant true
      %21 = arith.xori %2, %true_9 : i1
      %22 = arith.extui %21 : i1 to i32
      %c0_i32_10 = arith.constant 0 : i32
      %23 = arith.cmpi ne, %22, %c0_i32_10 : i32
      scf.if %23 {
        %c0_11 = arith.constant 0 : index
        %c0_12 = arith.constant 0 : index
        %24 = vector.load %arg5[%c0_11, %c0_12] : memref<16x128xf32, #tpu.memory_space<vmem>>, vector<16x128xf32>
        %25 = arith.addf %24, %18 : vector<16x128xf32>
        %c0_13 = arith.constant 0 : index
        %c0_14 = arith.constant 0 : index
        %26 = vector.load %arg5[%c0_13, %c0_14] : memref<16x128xf32, #tpu.memory_space<vmem>>, vector<16x128xf32>
        tpu.vector_store %arg5[%c0_13, %c0_14], %25 {strides = array<i32>} : memref<16x128xf32, #tpu.memory_space<vmem>>, vector<16x128xf32>,
      } else {
      }
    } else {
    }
    %11 = arith.extui %3 : i1 to i32
    %c0_i32_5 = arith.constant 0 : i32
    %12 = arith.cmpi ne, %11, %c0_i32_5 : i32
    scf.if %12 {
      %16 = tpu.iota {dimensions = array<i32: 0>} : vector<16x128xi32>
      %c16_i32 = arith.constant 16 : i32
      %17 = arith.muli %1, %c16_i32 : i32
      %18 = vector.broadcast %17 : i32 to vector<16x128xi32>
      %19 = arith.addi %18, %16 : vector<16x128xi32>
      %c16_i32_8 = arith.constant 16 : i32
      %20 = vector.broadcast %c16_i32_8 : i32 to vector<16x128xi32>
      %21 = arith.cmpi slt, %19, %20 : vector<16x128xi32>
      %22 = arith.mulf %7, %7 : vector<16x128xf32>
      %23 = arith.mulf %5, %5 : vector<16x128xf32>
      %24 = arith.addf %22, %23 : vector<16x128xf32>
      %cst_9 = arith.constant 0.000000e+00 : f32
      %25 = vector.broadcast %cst_9 : f32 to vector<16x128xf32>
      %26 = arith.select %21, %24, %25 : vector<16x128xi1>, vector<16x128xf32>
      %27 = arith.extui %2 : i1 to i32
      %c0_i32_10 = arith.constant 0 : i32
      %28 = arith.cmpi ne, %27, %c0_i32_10 : i32
      scf.if %28 {
        %c0_13 = arith.constant 0 : index
        %c0_14 = arith.constant 0 : index
        %32 = vector.load %arg5[%c0_13, %c0_14] : memref<16x128xf32, #tpu.memory_space<vmem>>, vector<16x128xf32>
        tpu.vector_store %arg5[%c0_13, %c0_14], %26 {strides = array<i32>} : memref<16x128xf32, #tpu.memory_space<vmem>>, vector<16x128xf32>,
      } else {
      }
      %true_11 = arith.constant true
      %29 = arith.xori %2, %true_11 : i1
      %30 = arith.extui %29 : i1 to i32
      %c0_i32_12 = arith.constant 0 : i32
      %31 = arith.cmpi ne, %30, %c0_i32_12 : i32
      scf.if %31 {
        %c0_13 = arith.constant 0 : index
        %c0_14 = arith.constant 0 : index
        %32 = vector.load %arg5[%c0_13, %c0_14] : memref<16x128xf32, #tpu.memory_space<vmem>>, vector<16x128xf32>
        %33 = arith.addf %32, %26 : vector<16x128xf32>
        %c0_15 = arith.constant 0 : index
        %c0_16 = arith.constant 0 : index
        %34 = vector.load %arg5[%c0_15, %c0_16] : memref<16x128xf32, #tpu.memory_space<vmem>>, vector<16x128xf32>
        tpu.vector_store %arg5[%c0_15, %c0_16], %33 {strides = array<i32>} : memref<16x128xf32, #tpu.memory_space<vmem>>, vector<16x128xf32>,
      } else {
      }
    } else {
    }
    %c0_i32_6 = arith.constant 0 : i32
    %13 = arith.cmpi eq, %arg1, %c0_i32_6 : i32
    %14 = arith.extui %13 : i1 to i32
    %c0_i32_7 = arith.constant 0 : i32
    %15 = arith.cmpi ne, %14, %c0_i32_7 : i32
    scf.if %15 {
      %c0_8 = arith.constant 0 : index
      %c0_9 = arith.constant 0 : index
      %16 = vector.load %arg5[%c0_8, %c0_9] : memref<16x128xf32, #tpu.memory_space<vmem>>, vector<16x128xf32>
      %cst_10 = arith.constant dense<0.000000e+00> : vector<128xf32>
      %17 = vector.multi_reduction <add>, %16, %cst_10 [0] : vector<16x128xf32> to vector<128xf32>
      %18 = vector.shape_cast %17 : vector<128xf32> to vector<1x128xf32>
      %19 = vector.shape_cast %18 : vector<1x128xf32> to vector<1x1x128xf32>
      %c0_11 = arith.constant 0 : index
      %c0_12 = arith.constant 0 : index
      %c0_13 = arith.constant 0 : index
      %20 = vector.load %arg4[%c0_11, %c0_12, %c0_13] : memref<1x1x128xf32, #tpu.memory_space<vmem>>, vector<1x1x128xf32>
      tpu.vector_store %arg4[%c0_11, %c0_12, %c0_13], %19 {strides = array<i32>} : memref<1x1x128xf32, #tpu.memory_space<vmem>>, vector<1x1x128xf32>,
    } else {
    }
    return
  }
  func.func @transform_0(%arg0: i32, %arg1: i32) -> (i32, i32) {
    %c1_i32 = arith.constant 1 : i32
    %0 = arith.muli %arg0, %c1_i32 : i32
    %1 = arith.addi %0, %arg1 : i32
    %c0_i32 = arith.constant 0 : i32
    %2 = arith.minsi %1, %c0_i32 : i32
    %c0_i32_0 = arith.constant 0 : i32
    %c0_i32_1 = arith.constant 0 : i32
    return %2, %c0_i32_0 : i32, i32
  }
  func.func @transform_1(%arg0: i32, %arg1: i32) -> (i32, i32) {
    %c1_i32 = arith.constant 1 : i32
    %0 = arith.muli %arg0, %c1_i32 : i32
    %1 = arith.addi %0, %arg1 : i32
    %c0_i32 = arith.constant 0 : i32
    %2 = arith.minsi %1, %c0_i32 : i32
    %c0_i32_0 = arith.constant 0 : i32
    %c0_i32_1 = arith.constant 0 : i32
    return %2, %c0_i32_0 : i32, i32
  }
  func.func @transform_2(%arg0: i32, %arg1: i32) -> (i32, i32, i32) {
    %c0_i32 = arith.constant 0 : i32
    %c0_i32_0 = arith.constant 0 : i32
    %c0_i32_1 = arith.constant 0 : i32
    return %arg0, %c0_i32, %c0_i32_0 : i32, i32, i32
  }
}

</mosaic_0001>

<llo_original>
// kernel: cyclegan_discriminator_loss.1
$region0: #{cyclegan_discriminator_loss.1}
  #allocation0 [shape = 'u32[]', space=smem, size = 0x4, offset = 0x4, fixed_abs, tag = 'smem constant byte address 0x4 - core index']
  #allocation1 [shape = 'u32[144,128]{1,0:T(1,128)}', space=vmem, size = 0x12000, scoped, tag = 'internal scratch']
  #allocation2 [shape = 'f32[16,128]{1,0:T(8,128)}', space=vmem, size = 0x2000, scoped, tag = 'scratch operand']
  %s0 = inlined_call_operand.vmem [shape: f32[16,128], index: 0, kind: input, shape index: {}]
  %s1 = inlined_call_operand.vmem [shape: f32[16,128], index: 1, kind: input, shape index: {}]
  %s2 = inlined_call_operand.vmem [shape: f32[1,1,128], index: 2, kind: output, shape index: {}]
  %s3 = sld [smem:[#allocation0]]
  $region46: #{cyclegan_discriminator_loss.1} parent=0
    _
  %s5 = ssub.s32 1, %s3
  %s6 = scalar_select 0, %s5, %s3
  // Predicated region
  $region2: #{cyclegan_discriminator_loss.1} parent=0 // pred_check
    _
  $region3: #{cyclegan_discriminator_loss.1} parent=0 // pred_check_branch
    %8 = sbr.rel (0) target = $region5
  $region4: #{cyclegan_discriminator_loss.1} parent=0 // pred_region
    %s9 = sadd.s32 0, 0
    %p10 = scmp.lt.s32.totalorder %s9, 0
    %s11 = scalar_select %p10, %s9, 0
    %s12 = smul.u32 2, %s11
    %p13 = scmp.lt.s32.totalorder %s12, 1
    %s14 = scalar_select %p13, %s12, 1
    %s15 = smul.addr %s14, 8
    %s16 = scalar_lea.vmem %s0, %s15
    %s17 = sadd.s32 0, 0
    %p18 = scmp.lt.s32.totalorder %s17, 0
    %s19 = scalar_select %p18, %s17, 0
    %s20 = smul.u32 2, %s19
  $region5: #{cyclegan_discriminator_loss.1} parent=0 // pred_fallthru
    _
  // Predicated region
  $region6: #{cyclegan_discriminator_loss.1} parent=0 // pred_check
    _
  $region7: #{cyclegan_discriminator_loss.1} parent=0 // pred_check_branch
    %22 = sbr.rel (0) target = $region9
  $region8: #{cyclegan_discriminator_loss.1} parent=0 // pred_region
    %s23 = sadd.s32 0, 0
    %p24 = scmp.lt.s32.totalorder %s23, 0
    %s25 = scalar_select %p24, %s23, 0
    %s26 = smul.u32 2, %s25
    %p27 = scmp.lt.s32.totalorder %s26, 1
    %s28 = scalar_select %p27, %s26, 1
    %s29 = smul.addr %s28, 8
    %s30 = scalar_lea.vmem %s1, %s29
    %s31 = sadd.s32 0, 0
    %p32 = scmp.lt.s32.totalorder %s31, 0
    %s33 = scalar_select %p32, %s31, 0
    %s34 = smul.u32 2, %s33
  $region9: #{cyclegan_discriminator_loss.1} parent=0 // pred_fallthru
    _
  %s35 = sadd.s32 0, 0
  %p36 = scmp.lt.s32.totalorder %s35, 0
  %s37 = scalar_select %p36, %s35, 0
  %s38 = smul.u32 2, %s37
  %p39 = scmp.lt.s32.totalorder %s38, 1
  %s40 = scalar_select %p39, %s38, 1
  %s41 = smul.addr %s40, 8
  %s42 = scalar_lea.vmem %s0, %s41
  %s43 = sadd.s32 0, 0
  %p44 = scmp.lt.s32.totalorder %s43, 0
  %s45 = scalar_select %p44, %s43, 0
  %s46 = smul.u32 2, %s45
  %p47 = scmp.lt.s32.totalorder %s46, 1
  %s48 = scalar_select %p47, %s46, 1
  %s49 = smul.addr %s48, 8
  %s50 = scalar_lea.vmem %s1, %s49
  %s51 = sadd.s32 0, 0
  %p52 = scmp.lt.s32.totalorder %s51, 0
  %s53 = scalar_select %p52, %s51, 0
  %s54 = smul.u32 2, %s53
  %p55 = scmp.lt.s32.totalorder %s54, 1
  %s56 = scalar_select %p55, %s54, 1
  %s57 = smul.addr %s56, 8
  %s58 = scalar_lea.vmem %s0, %s57
  %s59 = sadd.s32 0, 0
  %p60 = scmp.lt.s32.totalorder %s59, 0
  %s61 = scalar_select %p60, %s59, 0
  %s62 = smul.u32 2, %s61
  %s63 = sadd.s32 0, 0
  %p64 = scmp.lt.s32.totalorder %s63, 0
  %s65 = scalar_select %p64, %s63, 0
  %s66 = smul.u32 2, %s65
  %p67 = scmp.lt.s32.totalorder %s66, 1
  %s68 = scalar_select %p67, %s66, 1
  %s69 = smul.addr %s68, 8
  %s70 = scalar_lea.vmem %s1, %s69
  %s71 = sadd.s32 0, 0
  %p72 = scmp.lt.s32.totalorder %s71, 0
  %s73 = scalar_select %p72, %s71, 0
  %s74 = smul.u32 2, %s73
  %s75 = sadd.s32 0, 0
  %p76 = scmp.eq.s32.totalorder 0, 0
  %p77 = scmp.ge.s32.totalorder %s75, 0
  %v78 = vld [vmem:[%s58] sm:$0xff]
  %v79 = vld [vmem:[%s58 + $0x8] sm:$0xff]
  %v80 = vld [vmem:[%s70] sm:$0xff]
  %v81 = vld [vmem:[%s70 + $0x8] sm:$0xff]
  %v82 = vsub.f32 %v78, 1.0
  %v83 = vsub.f32 %v79, 1.0
  %p84 = scmp.lt.s32.totalorder %s75, 0
  // Predicated region
  $region10: #{cyclegan_discriminator_loss.1} parent=0 // pred_check
    %p85 = pneg %p84
  $region11: #{cyclegan_discriminator_loss.1} parent=0 // pred_check_branch
    %87 = sbr.rel (%p85) target = $region13
  $region12: #{cyclegan_discriminator_loss.1} parent=0 // pred_region
    %v88 = vmul.f32 %v82, %v82
    %v89 = vmul.f32 %v83, %v83
    %v90 = vmul.f32 %v80, %v80
    %v91 = vmul.f32 %v81, %v81
    %v92 = vadd.f32 %v88, %v90
    %v93 = vadd.f32 %v89, %v91
    // Predicated region
    $region14: #{cyclegan_discriminator_loss.1} parent=12 // pred_check
      %p94 = pneg %p76
    $region15: #{cyclegan_discriminator_loss.1} parent=12 // pred_check_branch
      %96 = sbr.rel (%p94) target = $region17
    $region16: #{cyclegan_discriminator_loss.1} parent=12 // pred_region
      %97 = vst [vmem:[#allocation2] sm:$0xff] %v92
      %98 = vst [vmem:[#allocation2 + $0x8] sm:$0xff] %v93
    $region17: #{cyclegan_discriminator_loss.1} parent=12 // pred_fallthru
      _
    %p99 = scmp.ne.s32.totalorder 0, 0
    // Predicated region
    $region18: #{cyclegan_discriminator_loss.1} parent=12 // pred_check
      %p100 = pneg %p99
    $region19: #{cyclegan_discriminator_loss.1} parent=12 // pred_check_branch
      %102 = sbr.rel (%p100) target = $region21
    $region20: #{cyclegan_discriminator_loss.1} parent=12 // pred_region
      %v103 = vld [vmem:[#allocation2] sm:$0xff]
      %v104 = vld [vmem:[#allocation2 + $0x8] sm:$0xff]
      %v105 = vadd.f32 %v103, %v92
      %v106 = vadd.f32 %v104, %v93
      %107 = vst [vmem:[#allocation2] sm:$0xff] %v105
      %108 = vst [vmem:[#allocation2 + $0x8] sm:$0xff] %v106
    $region21: #{cyclegan_discriminator_loss.1} parent=12 // pred_fallthru
      _
  $region13: #{cyclegan_discriminator_loss.1} parent=0 // pred_fallthru
    _
  // Predicated region
  $region22: #{cyclegan_discriminator_loss.1} parent=0 // pred_check
    %p109 = pneg %p77
  $region23: #{cyclegan_discriminator_loss.1} parent=0 // pred_check_branch
    %111 = sbr.rel (%p109) target = $region25
  $region24: #{cyclegan_discriminator_loss.1} parent=0 // pred_region
    %v112 = vlaneseq
    %v113 = vshrl.u32 %v112, 7
    %v114 = vadd.s32 %v113, 8
    %s115 = smul.u32 %s75, 16
    %v116 = vstv %s115
    %v117 = vadd.s32 %v116, %v113
    %v118 = vadd.s32 %v116, %v114
    %vm119 = vcmp.lt.s32.totalorder %v117, 16
    %vm120 = vcmp.lt.s32.totalorder %v118, 16
    %v121 = vmul.f32 %v82, %v82
    %v122 = vmul.f32 %v83, %v83
    %v123 = vmul.f32 %v80, %v80
    %v124 = vmul.f32 %v81, %v81
    %v125 = vadd.f32 %v121, %v123
    %v126 = vadd.f32 %v122, %v124
    %v127 = vsel %vm119, %v125, 0.0
    %v128 = vsel %vm120, %v126, 0.0
    // Predicated region
    $region26: #{cyclegan_discriminator_loss.1} parent=24 // pred_check
      %p129 = pneg %p76
    $region27: #{cyclegan_discriminator_loss.1} parent=24 // pred_check_branch
      %131 = sbr.rel (%p129) target = $region29
    $region28: #{cyclegan_discriminator_loss.1} parent=24 // pred_region
      %132 = vst [vmem:[#allocation2] sm:$0xff] %v127
      %133 = vst [vmem:[#allocation2 + $0x8] sm:$0xff] %v128
    $region29: #{cyclegan_discriminator_loss.1} parent=24 // pred_fallthru
      _
    %p134 = scmp.ne.s32.totalorder 0, 0
    // Predicated region
    $region30: #{cyclegan_discriminator_loss.1} parent=24 // pred_check
      %p135 = pneg %p134
    $region31: #{cyclegan_discriminator_loss.1} parent=24 // pred_check_branch
      %137 = sbr.rel (%p135) target = $region33
    $region32: #{cyclegan_discriminator_loss.1} parent=24 // pred_region
      %v138 = vld [vmem:[#allocation2] sm:$0xff]
      %v139 = vld [vmem:[#allocation2 + $0x8] sm:$0xff]
      %v140 = vadd.f32 %v138, %v127
      %v141 = vadd.f32 %v139, %v128
      %142 = vst [vmem:[#allocation2] sm:$0xff] %v140
      %143 = vst [vmem:[#allocation2 + $0x8] sm:$0xff] %v141
    $region33: #{cyclegan_discriminator_loss.1} parent=24 // pred_fallthru
      _
  $region25: #{cyclegan_discriminator_loss.1} parent=0 // pred_fallthru
    _
  // Predicated region
  $region34: #{cyclegan_discriminator_loss.1} parent=0 // pred_check
    %p144 = pneg %p76
  $region35: #{cyclegan_discriminator_loss.1} parent=0 // pred_check_branch
    %146 = sbr.rel (%p144) target = $region37
  $region36: #{cyclegan_discriminator_loss.1} parent=0 // pred_region
    %v147 = vld [vmem:[#allocation2] sm:$0xff]
    %v148 = vld [vmem:[#allocation2 + $0x8] sm:$0xff]
    %v149 = vadd.f32 %v147, %v148
    %v150 = vrot.slane %v149, 4
    %v151 = vadd.f32 %v149, %v150
    %v152 = vrot.slane %v151, 2
    %v153 = vadd.f32 %v151, %v152
    %v154 = vrot.slane %v153, 1
    %v155 = vadd.f32 %v153, %v154
    %156 = vst [vmem:[%s2] sm:$0x1] %v155
  $region37: #{cyclegan_discriminator_loss.1} parent=0 // pred_fallthru
    _
  // Predicated region
  $region38: #{cyclegan_discriminator_loss.1} parent=0 // pred_check
    _
  $region39: #{cyclegan_discriminator_loss.1} parent=0 // pred_check_branch
    %158 = sbr.rel (0) target = $region41
  $region40: #{cyclegan_discriminator_loss.1} parent=0 // pred_region
    _
  $region41: #{cyclegan_discriminator_loss.1} parent=0 // pred_fallthru
    _
  // Predicated region
  $region42: #{cyclegan_discriminator_loss.1} parent=0 // pred_check
    _
  $region43: #{cyclegan_discriminator_loss.1} parent=0 // pred_check_branch
    %160 = sbr.rel (0) target = $region45
  $region44: #{cyclegan_discriminator_loss.1} parent=0 // pred_region
    _
  $region45: #{cyclegan_discriminator_loss.1} parent=0 // pred_fallthru
    _

</llo_original>
